<compile_context>
chip_gen: v6e
topology: v6e:2x2x1
jax: 0.10.0
libtpu: 0.0.40
codegen_flags: <defaults>
</compile_context>

<pallas_src>
import functools

import jax
import jax.numpy as jnp
from jax.experimental import pallas as pl
from jax.experimental.pallas import tpu as pltpu

STATE_N = 3        # Pendulum-v0 observation dim
ACTION_N = 1       # Pendulum-v0 action dim
HIDDEN = 84        # logical hidden width (PyTorch module)
HID_PAD = 128      # lane-padded hidden width used inside the kernel
_LANE = 128        # TPU lane width (last-dim tile)
_DEFAULT_MAX_TB = 2048


def _round_up(n, m):
    return ((n + m - 1) // m) * m


def _num_tensorcores():
    """Best-effort detection of TensorCores per chip (2 on v7x / megacore parts)."""
    try:
        kind = jax.devices()[0].device_kind.lower()
    except Exception:
        return 1
    return 2 if any(tag in kind for tag in ("v7", "v5p", "v4")) else 1


_NUM_TC = _num_tensorcores()


def _vmem_limit_bytes(block_b, fc2_itemsize):
    """Explicit scoped-VMEM budget from the real per-step footprint (v5e default is 16 MiB)."""
    f32 = 4
    # x / out blocks: lane-dense, sublane-padded to 8 rows, double-buffered each.
    io = 2 * 2 * (8 * block_b * f32)
    # Resident weights/biases (lane/sublane padded); counted twice for pipeline buffers.
    weights = 2 * (3 * HID_PAD * _LANE * f32            # w1t, b1t, b2t pad to (128,128)
                   + HID_PAD * HID_PAD * fc2_itemsize   # w2t
                   + 2 * 8 * _LANE * f32)               # w34t, b34t pad to (8,128)
    # f32 activations (h1, h2, heads) plus compiler temporaries.
    acts = 4 * HID_PAD * block_b * f32
    est = io + weights + acts
    return int(min(64 * 1024 * 1024, max(16 * 1024 * 1024, 2 * est)))


def _policy_kernel(x_ref,
                   w1_ref, b1_ref,
                   w2_ref, b2_ref,
                   w34_ref, b34_ref,
                   out_ref):
    x = x_ref[...]                                   # (STATE_N, TB)  feature-major
    w1 = w1_ref[...]                                 # (HID_PAD, STATE_N)
    tb = x.shape[1]

    # fc1 on the VPU: a K=3 contraction would waste >97% of an MXU pass.
    h1 = jnp.broadcast_to(b1_ref[...], (HID_PAD, tb))
    for k in range(STATE_N):
        h1 = h1 + w1[:, k:k + 1] * x[k:k + 1, :]
    h1 = jnp.maximum(h1, 0.0)                        # (HID_PAD, TB)

    # fc2 on the MXU: (128,128) x (128,TB); bf16 weights supported (pack_params).
    h1c = h1.astype(w2_ref.dtype)
    h2 = jnp.dot(w2_ref[...], h1c, preferred_element_type=jnp.float32) + b2_ref[...]
    h2 = jnp.maximum(h2, 0.0)                        # (HID_PAD, TB)

    # Fused heads: one matmul, one lane-dense store. rows [0,ACTION_N)=mu, rest=sigma.
    heads = jnp.dot(w34_ref[...], h2, preferred_element_type=jnp.float32) + b34_ref[...]
    row = jax.lax.broadcasted_iota(jnp.int32, heads.shape, 0)
    out_ref[...] = jnp.where(row < ACTION_N, jnp.tanh(heads), jnp.maximum(heads, 0.0))


def pack_params(params, fc2_dtype=jnp.float32):
    """Host-side packing: transpose to feature-major, zero-pad hidden 84->128,
    fuse mu/sigma heads.  fc2_dtype=jnp.bfloat16 enables the bf16 MXU fast path."""
    w1, b1, w2, b2, w3, b3, w4, b4 = params
    z = jnp.zeros
    w1t = z((HID_PAD, STATE_N), jnp.float32).at[:HIDDEN, :].set(w1.T)
    b1t = z((HID_PAD, 1), jnp.float32).at[:HIDDEN, :].set(b1.T)
    w2t = z((HID_PAD, HID_PAD), jnp.float32).at[:HIDDEN, :HIDDEN].set(w2.T).astype(fc2_dtype)
    b2t = z((HID_PAD, 1), jnp.float32).at[:HIDDEN, :].set(b2.T)
    w34t = (z((2 * ACTION_N, HID_PAD), jnp.float32)
            .at[0:ACTION_N, :HIDDEN].set(w3.T)
            .at[ACTION_N:2 * ACTION_N, :HIDDEN].set(w4.T))
    b34t = jnp.concatenate([b3.T, b4.T], axis=0)     # (2*ACTION_N, 1)
    return (w1t, b1t, w2t, b2t, w34t, b34t)


@functools.partial(jax.jit, static_argnames=("block_b",))
def policy_forward(obs, packed_params, block_b=None):
    """obs: (B, ...) -> (mu, sigma), each (B, ACTION_N), float32."""
    b = obs.shape[0]
    x = obs.reshape(b, -1).astype(jnp.float32)       # obs.view(obs.size(0), -1)
    x_t = x.T                                        # feature-major (STATE_N, B)

    if block_b is None:
        block_b = min(_DEFAULT_MAX_TB, _round_up(b, _LANE))
        if _NUM_TC >= 2 and b > _LANE:
            # Guarantee >= 2 grid steps so the "parallel" batch axis spans both TCs.
            half = _round_up((_round_up(b, _LANE) + 1) // 2, _LANE)
            block_b = min(block_b, half)
    else:
        block_b = _round_up(block_b, _LANE)          # lane-dim divisibility rule

    b_pad = _round_up(b, block_b)
    if b_pad != b:
        x_t = jnp.pad(x_t, ((0, 0), (0, b_pad - b)))
    grid_b = b_pad // block_b

    w1t, b1t, w2t, b2t, w34t, b34t = packed_params
    const = lambda shape: pl.BlockSpec(shape, lambda i: (0, 0))   # weights stay resident

    weight_bytes = sum(int(p.size) * p.dtype.itemsize for p in packed_params)
    flops_per_row = 2 * (STATE_N * HID_PAD + HID_PAD * HID_PAD + HID_PAD * 2 * ACTION_N)
    cost = pl.CostEstimate(
        flops=int(b_pad) * flops_per_row,
        transcendentals=int(b_pad) * ACTION_N,
        bytes_accessed=int(b_pad) * (STATE_N + 2 * ACTION_N) * 4 + weight_bytes,
    )

    out = pl.pallas_call(
        _policy_kernel,
        out_shape=jax.ShapeDtypeStruct((2 * ACTION_N, b_pad), jnp.float32),
        grid=(grid_b,),
        in_specs=[
            pl.BlockSpec((STATE_N, block_b), lambda i: (0, i)),       # x tile (lane-dense)
            const(w1t.shape), const(b1t.shape),
            const(w2t.shape), const(b2t.shape),
            const(w34t.shape), const(b34t.shape),
        ],
        out_specs=pl.BlockSpec((2 * ACTION_N, block_b), lambda i: (0, i)),
        compiler_params=pltpu.CompilerParams(
            dimension_semantics=("parallel",),                        # megacore sharding
            vmem_limit_bytes=_vmem_limit_bytes(block_b, w2t.dtype.itemsize)),
        cost_estimate=cost,
    )(x_t, w1t, b1t, w2t, b2t, w34t, b34t)

    mu = out[0:ACTION_N, :b].T
    sigma = out[ACTION_N:2 * ACTION_N, :b].T
    # .detach() in the PyTorch forward only severs autograd; values unchanged.
    return mu, sigma


def init_params(key):
    """Deterministic init mimicking PyTorch's default Linear init
    (uniform(-1/sqrt(fan_in), 1/sqrt(fan_in)))."""
    def linear(key, fan_in, fan_out):
        kw, kb = jax.random.split(key)
        bound = 1.0 / jnp.sqrt(jnp.float32(fan_in))
        w = jax.random.uniform(kw, (fan_in, fan_out), jnp.float32, -bound, bound)
        b = jax.random.uniform(kb, (1, fan_out), jnp.float32, -bound, bound)
        return w, b

    k1, k2, k3, k4 = jax.random.split(key, 4)
    w1, b1 = linear(k1, STATE_N, HIDDEN)
    w2, b2 = linear(k2, HIDDEN, HIDDEN)
    w3, b3 = linear(k3, HIDDEN, ACTION_N)
    w4, b4 = linear(k4, HIDDEN, ACTION_N)
    return (w1, b1, w2, b2, w3, b3, w4, b4)


def _reference(obs, params):
    """Pure-JAX reference matching the PyTorch forward."""
    w1, b1, w2, b2, w3, b3, w4, b4 = params
    x = obs.reshape(obs.shape[0], -1).astype(jnp.float32)
    h1 = jnp.maximum(x @ w1 + b1, 0.0)
    h2 = jnp.maximum(h1 @ w2 + b2, 0.0)
    mu = jnp.tanh(h2 @ w3 + b3)
    sigma = jnp.maximum(h2 @ w4 + b4, 0.0)
    return mu, sigma


if __name__ == "__main__":
    key = jax.random.PRNGKey(0)
    k_params, k_obs1, k_obs2 = jax.random.split(key, 3)

    params = init_params(k_params)
    packed_f32 = pack_params(params)

    # Small batch (single grid step; batch-padding path).
    batch = 8
    obs = jax.random.normal(k_obs1, (batch, STATE_N), dtype=jnp.float32)
    mu, sigma = policy_forward(obs, packed_f32)
    jax.block_until_ready((mu, sigma))
    mu_r, sigma_r = _reference(obs, params)
    assert mu.shape == (batch, ACTION_N) and sigma.shape == (batch, ACTION_N)
    assert jnp.allclose(mu, mu_r, rtol=1e-4, atol=1e-4)
    assert jnp.allclose(sigma, sigma_r, rtol=1e-4, atol=1e-4)
    assert bool(jnp.all(jnp.abs(mu) <= 1.0)) and bool(jnp.all(sigma >= 0.0))

    # Ragged batch with an explicit tile -> multi-step grid + padding path.
    batch2 = 300
    obs2 = jax.random.normal(k_obs2, (batch2, STATE_N), dtype=jnp.float32)
    mu2, sigma2 = policy_forward(obs2, packed_f32, block_b=128)
    jax.block_until_ready((mu2, sigma2))
    mu2_r, sigma2_r = _reference(obs2, params)
    assert mu2.shape == (batch2, ACTION_N) and sigma2.shape == (batch2, ACTION_N)
    assert jnp.allclose(mu2, mu2_r, rtol=1e-4, atol=1e-4)
    assert jnp.allclose(sigma2, sigma2_r, rtol=1e-4, atol=1e-4)

    # Optional bf16 fc2 path (bf16-native MXU on v6e/v7x) at relaxed tolerance.
    packed_bf16 = pack_params(params, fc2_dtype=jnp.bfloat16)
    mu3, sigma3 = policy_forward(obs2, packed_bf16)
    jax.block_until_ready((mu3, sigma3))
    assert jnp.allclose(mu3, mu2_r, rtol=2e-2, atol=2e-2)
    assert jnp.allclose(sigma3, sigma2_r, rtol=2e-2, atol=2e-2)

    print("KERNEL_OK")
</pallas_src>

<mosaic_0001>
module attributes {stable_mosaic.version = 11 : i64} {
  func.func @_policy_kernel(%arg0: i32, %arg1: memref<3x128xf32, #tpu.memory_space<vmem>>, %arg2: memref<128x3xf32, #tpu.memory_space<vmem>>, %arg3: memref<128x1xf32, #tpu.memory_space<vmem>>, %arg4: memref<128x128xf32, #tpu.memory_space<vmem>>, %arg5: memref<128x1xf32, #tpu.memory_space<vmem>>, %arg6: memref<2x128xf32, #tpu.memory_space<vmem>>, %arg7: memref<2x1xf32, #tpu.memory_space<vmem>>, %arg8: memref<2x128xf32, #tpu.memory_space<vmem>>) attributes {dimension_semantics = [#tpu.dimension_semantics<parallel>], iteration_bounds = array<i64: 1>, scalar_prefetch = 0 : i64, scratch_operands = 0 : i64, tpu.core_type = #tpu.core_type<tc>, window_params = [{transform_indices = @transform_0, window_bounds = array<i64: 3, 128>}, {pipeline_mode = #tpu.pipeline_mode<synchronous>, transform_indices = @transform_1, window_bounds = array<i64: 128, 3>}, {pipeline_mode = #tpu.pipeline_mode<synchronous>, transform_indices = @transform_2, window_bounds = array<i64: 128, 1>}, {pipeline_mode = #tpu.pipeline_mode<synchronous>, transform_indices = @transform_3, window_bounds = array<i64: 128, 128>}, {pipeline_mode = #tpu.pipeline_mode<synchronous>, transform_indices = @transform_4, window_bounds = array<i64: 128, 1>}, {pipeline_mode = #tpu.pipeline_mode<synchronous>, transform_indices = @transform_5, window_bounds = array<i64: 2, 128>}, {pipeline_mode = #tpu.pipeline_mode<synchronous>, transform_indices = @transform_6, window_bounds = array<i64: 2, 1>}, {transform_indices = @transform_7, window_bounds = array<i64: 2, 128>}]} {
    %c0 = arith.constant 0 : index
    %c0_0 = arith.constant 0 : index
    %0 = vector.load %arg1[%c0, %c0_0] : memref<3x128xf32, #tpu.memory_space<vmem>>, vector<3x128xf32>
    %c0_1 = arith.constant 0 : index
    %c0_2 = arith.constant 0 : index
    %1 = vector.load %arg2[%c0_1, %c0_2] : memref<128x3xf32, #tpu.memory_space<vmem>>, vector<128x3xf32>
    %c0_3 = arith.constant 0 : index
    %c0_4 = arith.constant 0 : index
    %2 = vector.load %arg3[%c0_3, %c0_4] : memref<128x1xf32, #tpu.memory_space<vmem>>, vector<128x1xf32>
    %3 = vector.shape_cast %2 : vector<128x1xf32> to vector<128x1xf32>
    %4 = vector.broadcast %3 : vector<128x1xf32> to vector<128x128xf32>
    %5 = vector.extract_strided_slice %1 {offsets = [0, 0], sizes = [128, 1], strides = [1, 1]} : vector<128x3xf32> to vector<128x1xf32>
    %6 = vector.extract_strided_slice %0 {offsets = [0, 0], sizes = [1, 128], strides = [1, 1]} : vector<3x128xf32> to vector<1x128xf32>
    %7 = vector.broadcast %5 : vector<128x1xf32> to vector<128x128xf32>
    %8 = vector.broadcast %6 : vector<1x128xf32> to vector<128x128xf32>
    %9 = arith.mulf %7, %8 : vector<128x128xf32>
    %10 = arith.addf %4, %9 : vector<128x128xf32>
    %11 = vector.extract_strided_slice %1 {offsets = [0, 1], sizes = [128, 1], strides = [1, 1]} : vector<128x3xf32> to vector<128x1xf32>
    %12 = vector.extract_strided_slice %0 {offsets = [1, 0], sizes = [1, 128], strides = [1, 1]} : vector<3x128xf32> to vector<1x128xf32>
    %13 = vector.broadcast %11 : vector<128x1xf32> to vector<128x128xf32>
    %14 = vector.broadcast %12 : vector<1x128xf32> to vector<128x128xf32>
    %15 = arith.mulf %13, %14 : vector<128x128xf32>
    %16 = arith.addf %10, %15 : vector<128x128xf32>
    %17 = vector.extract_strided_slice %1 {offsets = [0, 2], sizes = [128, 1], strides = [1, 1]} : vector<128x3xf32> to vector<128x1xf32>
    %18 = vector.extract_strided_slice %0 {offsets = [2, 0], sizes = [1, 128], strides = [1, 1]} : vector<3x128xf32> to vector<1x128xf32>
    %19 = vector.broadcast %17 : vector<128x1xf32> to vector<128x128xf32>
    %20 = vector.broadcast %18 : vector<1x128xf32> to vector<128x128xf32>
    %21 = arith.mulf %19, %20 : vector<128x128xf32>
    %22 = arith.addf %16, %21 : vector<128x128xf32>
    %cst = arith.constant 0.000000e+00 : f32
    %23 = vector.broadcast %cst : f32 to vector<128x128xf32>
    %24 = arith.maximumf %22, %23 : vector<128x128xf32>
    %c0_5 = arith.constant 0 : index
    %c0_6 = arith.constant 0 : index
    %25 = vector.load %arg4[%c0_5, %c0_6] : memref<128x128xf32, #tpu.memory_space<vmem>>, vector<128x128xf32>
    %cst_7 = arith.constant dense<0.000000e+00> : vector<128x128xf32>
    %26 = tpu.matmul %25, %24, %cst_7 {dimension_numbers = #tpu.dot_dimension_numbers<[1], [0], [0], [1], [0, 0, 1, 1], [], []>} : vector<128x128xf32>, vector<128x128xf32>, vector<128x128xf32> -> vector<128x128xf32>
    %c0_8 = arith.constant 0 : index
    %c0_9 = arith.constant 0 : index
    %27 = vector.load %arg5[%c0_8, %c0_9] : memref<128x1xf32, #tpu.memory_space<vmem>>, vector<128x1xf32>
    %28 = vector.broadcast %27 : vector<128x1xf32> to vector<128x128xf32>
    %29 = arith.addf %26, %28 : vector<128x128xf32>
    %cst_10 = arith.constant 0.000000e+00 : f32
    %30 = vector.broadcast %cst_10 : f32 to vector<128x128xf32>
    %31 = arith.maximumf %29, %30 : vector<128x128xf32>
    %c0_11 = arith.constant 0 : index
    %c0_12 = arith.constant 0 : index
    %32 = vector.load %arg6[%c0_11, %c0_12] : memref<2x128xf32, #tpu.memory_space<vmem>>, vector<2x128xf32>
    %cst_13 = arith.constant dense<0.000000e+00> : vector<2x128xf32>
    %33 = tpu.matmul %32, %31, %cst_13 {dimension_numbers = #tpu.dot_dimension_numbers<[1], [0], [0], [1], [0, 0, 1, 1], [], []>} : vector<2x128xf32>, vector<128x128xf32>, vector<2x128xf32> -> vector<2x128xf32>
    %c0_14 = arith.constant 0 : index
    %c0_15 = arith.constant 0 : index
    %34 = vector.load %arg7[%c0_14, %c0_15] : memref<2x1xf32, #tpu.memory_space<vmem>>, vector<2x1xf32>
    %35 = vector.broadcast %34 : vector<2x1xf32> to vector<2x128xf32>
    %36 = arith.addf %33, %35 : vector<2x128xf32>
    %37 = tpu.iota {dimensions = array<i32: 0>} : vector<2x128xi32>
    %c1_i32 = arith.constant 1 : i32
    %38 = vector.broadcast %c1_i32 : i32 to vector<2x128xi32>
    %39 = arith.cmpi slt, %37, %38 : vector<2x128xi32>
    %40 = math.tanh %36 : vector<2x128xf32>
    %cst_16 = arith.constant 0.000000e+00 : f32
    %41 = vector.broadcast %cst_16 : f32 to vector<2x128xf32>
    %42 = arith.maximumf %36, %41 : vector<2x128xf32>
    %43 = arith.select %39, %40, %42 : vector<2x128xi1>, vector<2x128xf32>
    %c0_17 = arith.constant 0 : index
    %c0_18 = arith.constant 0 : index
    %44 = vector.load %arg8[%c0_17, %c0_18] : memref<2x128xf32, #tpu.memory_space<vmem>>, vector<2x128xf32>
    tpu.vector_store %arg8[%c0_17, %c0_18], %43 {strides = array<i32>} : memref<2x128xf32, #tpu.memory_space<vmem>>, vector<2x128xf32>,
    return
  }
  func.func @transform_0(%arg0: i32) -> (i32, i32) {
    %c0_i32 = arith.constant 0 : i32
    %c0_i32_0 = arith.constant 0 : i32
    return %c0_i32, %arg0 : i32, i32
  }
  func.func @transform_1(%arg0: i32) -> (i32, i32) {
    %c0_i32 = arith.constant 0 : i32
    %c0_i32_0 = arith.constant 0 : i32
    %c0_i32_1 = arith.constant 0 : i32
    return %c0_i32, %c0_i32_0 : i32, i32
  }
  func.func @transform_2(%arg0: i32) -> (i32, i32) {
    %c0_i32 = arith.constant 0 : i32
    %c0_i32_0 = arith.constant 0 : i32
    %c0_i32_1 = arith.constant 0 : i32
    return %c0_i32, %c0_i32_0 : i32, i32
  }
  func.func @transform_3(%arg0: i32) -> (i32, i32) {
    %c0_i32 = arith.constant 0 : i32
    %c0_i32_0 = arith.constant 0 : i32
    %c0_i32_1 = arith.constant 0 : i32
    return %c0_i32, %c0_i32_0 : i32, i32
  }
  func.func @transform_4(%arg0: i32) -> (i32, i32) {
    %c0_i32 = arith.constant 0 : i32
    %c0_i32_0 = arith.constant 0 : i32
    %c0_i32_1 = arith.constant 0 : i32
    return %c0_i32, %c0_i32_0 : i32, i32
  }
  func.func @transform_5(%arg0: i32) -> (i32, i32) {
    %c0_i32 = arith.constant 0 : i32
    %c0_i32_0 = arith.constant 0 : i32
    %c0_i32_1 = arith.constant 0 : i32
    return %c0_i32, %c0_i32_0 : i32, i32
  }
  func.func @transform_6(%arg0: i32) -> (i32, i32) {
    %c0_i32 = arith.constant 0 : i32
    %c0_i32_0 = arith.constant 0 : i32
    %c0_i32_1 = arith.constant 0 : i32
    return %c0_i32, %c0_i32_0 : i32, i32
  }
  func.func @transform_7(%arg0: i32) -> (i32, i32) {
    %c0_i32 = arith.constant 0 : i32
    %c0_i32_0 = arith.constant 0 : i32
    return %c0_i32, %arg0 : i32, i32
  }
}

</mosaic_0001>

<llo_original>
// kernel: policy_forward.1
$region0: #{policy_forward.1}
  #allocation0 [shape = 'u32[]', space=smem, size = 0x4, offset = 0x4, fixed_abs, tag = 'smem constant byte address 0x4 - core index']
  #allocation1 [shape = 'u32[144,128]{1,0:T(1,128)}', space=vmem, size = 0x12000, scoped, tag = 'internal scratch']
  %s0 = inlined_call_operand.vmem [shape: f32[3,128], index: 0, kind: input, shape index: {}]
  %s1 = inlined_call_operand.vmem [shape: f32[128,3], index: 1, kind: input, shape index: {}]
  %s2 = inlined_call_operand.vmem [shape: f32[128,1], index: 2, kind: input, shape index: {}]
  %s3 = inlined_call_operand.vmem [shape: f32[128,128], index: 3, kind: input, shape index: {}]
  %s4 = inlined_call_operand.vmem [shape: f32[128,1], index: 4, kind: input, shape index: {}]
  %s5 = inlined_call_operand.vmem [shape: f32[2,128], index: 5, kind: input, shape index: {}]
  %s6 = inlined_call_operand.vmem [shape: f32[2,1], index: 6, kind: input, shape index: {}]
  %s7 = inlined_call_operand.vmem [shape: f32[2,128], index: 7, kind: output, shape index: {}]
  %s8 = sld [smem:[#allocation0]]
  $region38: #{policy_forward.1} parent=0
    _
  %s10 = ssub.s32 1, %s8
  %s11 = scalar_select 0, %s10, %s8
  // Predicated region
  $region2: #{policy_forward.1} parent=0 // pred_check
    _
  $region3: #{policy_forward.1} parent=0 // pred_check_branch
    %13 = sbr.rel (0) target = $region5
  $region4: #{policy_forward.1} parent=0 // pred_region
    _
  $region5: #{policy_forward.1} parent=0 // pred_fallthru
    _
  // Predicated region
  $region6: #{policy_forward.1} parent=0 // pred_check
    _
  $region7: #{policy_forward.1} parent=0 // pred_check_branch
    %15 = sbr.rel (0) target = $region9
  $region8: #{policy_forward.1} parent=0 // pred_region
    _
  $region9: #{policy_forward.1} parent=0 // pred_fallthru
    _
  // Predicated region
  $region10: #{policy_forward.1} parent=0 // pred_check
    _
  $region11: #{policy_forward.1} parent=0 // pred_check_branch
    %17 = sbr.rel (0) target = $region13
  $region12: #{policy_forward.1} parent=0 // pred_region
    _
  $region13: #{policy_forward.1} parent=0 // pred_fallthru
    _
  // Predicated region
  $region14: #{policy_forward.1} parent=0 // pred_check
    _
  $region15: #{policy_forward.1} parent=0 // pred_check_branch
    %19 = sbr.rel (0) target = $region17
  $region16: #{policy_forward.1} parent=0 // pred_region
    _
  $region17: #{policy_forward.1} parent=0 // pred_fallthru
    _
  // Predicated region
  $region18: #{policy_forward.1} parent=0 // pred_check
    _
  $region19: #{policy_forward.1} parent=0 // pred_check_branch
    %21 = sbr.rel (0) target = $region21
  $region20: #{policy_forward.1} parent=0 // pred_region
    _
  $region21: #{policy_forward.1} parent=0 // pred_fallthru
    _
  // Predicated region
  $region22: #{policy_forward.1} parent=0 // pred_check
    _
  $region23: #{policy_forward.1} parent=0 // pred_check_branch
    %23 = sbr.rel (0) target = $region25
  $region24: #{policy_forward.1} parent=0 // pred_region
    _
  $region25: #{policy_forward.1} parent=0 // pred_fallthru
    _
  // Predicated region
  $region26: #{policy_forward.1} parent=0 // pred_check
    _
  $region27: #{policy_forward.1} parent=0 // pred_check_branch
    %25 = sbr.rel (0) target = $region29
  $region28: #{policy_forward.1} parent=0 // pred_region
    _
  $region29: #{policy_forward.1} parent=0 // pred_fallthru
    _
  %v26 = vld [vmem:[%s0] sm:$0x7]
  %v27 = vld [vmem:[%s1] sm:$0xff]
  %v28 = vld [vmem:[%s1 + $0x8] sm:$0xff]
  %v29 = vld [vmem:[%s1 + $0x10] sm:$0xff]
  %v30 = vld [vmem:[%s1 + $0x18] sm:$0xff]
  %v31 = vld [vmem:[%s1 + $0x20] sm:$0xff]
  %v32 = vld [vmem:[%s1 + $0x28] sm:$0xff]
  %v33 = vld [vmem:[%s1 + $0x30] sm:$0xff]
  %v34 = vld [vmem:[%s1 + $0x38] sm:$0xff]
  %v35 = vld [vmem:[%s1 + $0x40] sm:$0xff]
  %v36 = vld [vmem:[%s1 + $0x48] sm:$0xff]
  %v37 = vld [vmem:[%s1 + $0x50] sm:$0xff]
  %v38 = vld [vmem:[%s1 + $0x58] sm:$0xff]
  %v39 = vld [vmem:[%s1 + $0x60] sm:$0xff]
  %v40 = vld [vmem:[%s1 + $0x68] sm:$0xff]
  %v41 = vld [vmem:[%s1 + $0x70] sm:$0xff]
  %v42 = vld [vmem:[%s1 + $0x78] sm:$0xff]
  %v43 = vld [vmem:[%s2] sm:$0xff]
  %v44 = vld [vmem:[%s2 + $0x8] sm:$0xff]
  %v45 = vld [vmem:[%s2 + $0x10] sm:$0xff]
  %v46 = vld [vmem:[%s2 + $0x18] sm:$0xff]
  %v47 = vld [vmem:[%s2 + $0x20] sm:$0xff]
  %v48 = vld [vmem:[%s2 + $0x28] sm:$0xff]
  %v49 = vld [vmem:[%s2 + $0x30] sm:$0xff]
  %v50 = vld [vmem:[%s2 + $0x38] sm:$0xff]
  %v51 = vld [vmem:[%s2 + $0x40] sm:$0xff]
  %v52 = vld [vmem:[%s2 + $0x48] sm:$0xff]
  %v53 = vld [vmem:[%s2 + $0x50] sm:$0xff]
  %v54 = vld [vmem:[%s2 + $0x58] sm:$0xff]
  %v55 = vld [vmem:[%s2 + $0x60] sm:$0xff]
  %v56 = vld [vmem:[%s2 + $0x68] sm:$0xff]
  %v57 = vld [vmem:[%s2 + $0x70] sm:$0xff]
  %v58 = vld [vmem:[%s2 + $0x78] sm:$0xff]
  %60 = vset.pattern.permute.xlu0 0
  %61 = vperm.xlu0 %60, %v43
  %v62 = vpop.permute.xlu0 %61
  %65 = vset.pattern.permute.xlu0 0
  %66 = vperm.xlu0 %65, %v44
  %v67 = vpop.permute.xlu0 %66
  %70 = vset.pattern.permute.xlu0 0
  %71 = vperm.xlu0 %70, %v45
  %v72 = vpop.permute.xlu0 %71
  %75 = vset.pattern.permute.xlu0 0
  %76 = vperm.xlu0 %75, %v46
  %v77 = vpop.permute.xlu0 %76
  %80 = vset.pattern.permute.xlu0 0
  %81 = vperm.xlu0 %80, %v47
  %v82 = vpop.permute.xlu0 %81
  %85 = vset.pattern.permute.xlu0 0
  %86 = vperm.xlu0 %85, %v48
  %v87 = vpop.permute.xlu0 %86
  %90 = vset.pattern.permute.xlu0 0
  %91 = vperm.xlu0 %90, %v49
  %v92 = vpop.permute.xlu0 %91
  %95 = vset.pattern.permute.xlu0 0
  %96 = vperm.xlu0 %95, %v50
  %v97 = vpop.permute.xlu0 %96
  %100 = vset.pattern.permute.xlu0 0
  %101 = vperm.xlu0 %100, %v51
  %v102 = vpop.permute.xlu0 %101
  %105 = vset.pattern.permute.xlu0 0
  %106 = vperm.xlu0 %105, %v52
  %v107 = vpop.permute.xlu0 %106
  %110 = vset.pattern.permute.xlu0 0
  %111 = vperm.xlu0 %110, %v53
  %v112 = vpop.permute.xlu0 %111
  %115 = vset.pattern.permute.xlu0 0
  %116 = vperm.xlu0 %115, %v54
  %v117 = vpop.permute.xlu0 %116
  %120 = vset.pattern.permute.xlu0 0
  %121 = vperm.xlu0 %120, %v55
  %v122 = vpop.permute.xlu0 %121
  %125 = vset.pattern.permute.xlu0 0
  %126 = vperm.xlu0 %125, %v56
  %v127 = vpop.permute.xlu0 %126
  %130 = vset.pattern.permute.xlu0 0
  %131 = vperm.xlu0 %130, %v57
  %v132 = vpop.permute.xlu0 %131
  %135 = vset.pattern.permute.xlu0 0
  %136 = vperm.xlu0 %135, %v58
  %v137 = vpop.permute.xlu0 %136
  %140 = vset.pattern.permute.xlu0 0
  %141 = vperm.xlu0 %140, %v27
  %v142 = vpop.permute.xlu0 %141
  %145 = vset.pattern.permute.xlu0 0
  %146 = vperm.xlu0 %145, %v28
  %v147 = vpop.permute.xlu0 %146
  %150 = vset.pattern.permute.xlu0 0
  %151 = vperm.xlu0 %150, %v29
  %v152 = vpop.permute.xlu0 %151
  %155 = vset.pattern.permute.xlu0 0
  %156 = vperm.xlu0 %155, %v30
  %v157 = vpop.permute.xlu0 %156
  %160 = vset.pattern.permute.xlu0 0
  %161 = vperm.xlu0 %160, %v31
  %v162 = vpop.permute.xlu0 %161
  %165 = vset.pattern.permute.xlu0 0
  %166 = vperm.xlu0 %165, %v32
  %v167 = vpop.permute.xlu0 %166
  %170 = vset.pattern.permute.xlu0 0
  %171 = vperm.xlu0 %170, %v33
  %v172 = vpop.permute.xlu0 %171
  %175 = vset.pattern.permute.xlu0 0
  %176 = vperm.xlu0 %175, %v34
  %v177 = vpop.permute.xlu0 %176
  %180 = vset.pattern.permute.xlu0 0
  %181 = vperm.xlu0 %180, %v35
  %v182 = vpop.permute.xlu0 %181
  %185 = vset.pattern.permute.xlu0 0
  %186 = vperm.xlu0 %185, %v36
  %v187 = vpop.permute.xlu0 %186
  %190 = vset.pattern.permute.xlu0 0
  %191 = vperm.xlu0 %190, %v37
  %v192 = vpop.permute.xlu0 %191
  %195 = vset.pattern.permute.xlu0 0
  %196 = vperm.xlu0 %195, %v38
  %v197 = vpop.permute.xlu0 %196
  %200 = vset.pattern.permute.xlu0 0
  %201 = vperm.xlu0 %200, %v39
  %v202 = vpop.permute.xlu0 %201
  %205 = vset.pattern.permute.xlu0 0
  %206 = vperm.xlu0 %205, %v40
  %v207 = vpop.permute.xlu0 %206
  %210 = vset.pattern.permute.xlu0 0
  %211 = vperm.xlu0 %210, %v41
  %v212 = vpop.permute.xlu0 %211
  %215 = vset.pattern.permute.xlu0 0
  %216 = vperm.xlu0 %215, %v42
  %v217 = vpop.permute.xlu0 %216
  %v219 = vlaneseq
  %v220 = vshrl.u32 %v219, 7
  %v221 = vsub.s32 0, %v220
  %v222 = vrot.slane %v26, %v221
  %v223 = vmul.f32 %v142, %v222
  %v224 = vmul.f32 %v147, %v222
  %v225 = vmul.f32 %v152, %v222
  %v226 = vmul.f32 %v157, %v222
  %v227 = vmul.f32 %v162, %v222
  %v228 = vmul.f32 %v167, %v222
  %v229 = vmul.f32 %v172, %v222
  %v230 = vmul.f32 %v177, %v222
  %v231 = vmul.f32 %v182, %v222
  %v232 = vmul.f32 %v187, %v222
  %v233 = vmul.f32 %v192, %v222
  %v234 = vmul.f32 %v197, %v222
  %v235 = vmul.f32 %v202, %v222
  %v236 = vmul.f32 %v207, %v222
  %v237 = vmul.f32 %v212, %v222
  %v238 = vmul.f32 %v217, %v222
  %v239 = vadd.f32 %v62, %v223
  %v240 = vadd.f32 %v67, %v224
  %v241 = vadd.f32 %v72, %v225
  %v242 = vadd.f32 %v77, %v226
  %v243 = vadd.f32 %v82, %v227
  %v244 = vadd.f32 %v87, %v228
  %v245 = vadd.f32 %v92, %v229
  %v246 = vadd.f32 %v97, %v230
  %v247 = vadd.f32 %v102, %v231
  %v248 = vadd.f32 %v107, %v232
  %v249 = vadd.f32 %v112, %v233
  %v250 = vadd.f32 %v117, %v234
  %v251 = vadd.f32 %v122, %v235
  %v252 = vadd.f32 %v127, %v236
  %v253 = vadd.f32 %v132, %v237
  %v254 = vadd.f32 %v137, %v238
  %255 = vset.pattern.permute.xlu0 1
  %256 = vperm.xlu0 %255, %v27
  %v257 = vpop.permute.xlu0 %256
  %259 = vset.pattern.permute.xlu0 1
  %260 = vperm.xlu0 %259, %v28
  %v261 = vpop.permute.xlu0 %260
  %263 = vset.pattern.permute.xlu0 1
  %264 = vperm.xlu0 %263, %v29
  %v265 = vpop.permute.xlu0 %264
  %267 = vset.pattern.permute.xlu0 1
  %268 = vperm.xlu0 %267, %v30
  %v269 = vpop.permute.xlu0 %268
  %271 = vset.pattern.permute.xlu0 1
  %272 = vperm.xlu0 %271, %v31
  %v273 = vpop.permute.xlu0 %272
  %275 = vset.pattern.permute.xlu0 1
  %276 = vperm.xlu0 %275, %v32
  %v277 = vpop.permute.xlu0 %276
  %279 = vset.pattern.permute.xlu0 1
  %280 = vperm.xlu0 %279, %v33
  %v281 = vpop.permute.xlu0 %280
  %283 = vset.pattern.permute.xlu0 1
  %284 = vperm.xlu0 %283, %v34
  %v285 = vpop.permute.xlu0 %284
  %287 = vset.pattern.permute.xlu0 1
  %288 = vperm.xlu0 %287, %v35
  %v289 = vpop.permute.xlu0 %288
  %291 = vset.pattern.permute.xlu0 1
  %292 = vperm.xlu0 %291, %v36
  %v293 = vpop.permute.xlu0 %292
  %295 = vset.pattern.permute.xlu0 1
  %296 = vperm.xlu0 %295, %v37
  %v297 = vpop.permute.xlu0 %296
  %299 = vset.pattern.permute.xlu0 1
  %300 = vperm.xlu0 %299, %v38
  %v301 = vpop.permute.xlu0 %300
  %303 = vset.pattern.permute.xlu0 1
  %304 = vperm.xlu0 %303, %v39
  %v305 = vpop.permute.xlu0 %304
  %307 = vset.pattern.permute.xlu0 1
  %308 = vperm.xlu0 %307, %v40
  %v309 = vpop.permute.xlu0 %308
  %311 = vset.pattern.permute.xlu0 1
  %312 = vperm.xlu0 %311, %v41
  %v313 = vpop.permute.xlu0 %312
  %315 = vset.pattern.permute.xlu0 1
  %316 = vperm.xlu0 %315, %v42
  %v317 = vpop.permute.xlu0 %316
  %v319 = vlaneseq
  %v320 = vshrl.u32 %v319, 7
  %v321 = vsub.s32 1, %v320
  %v322 = vrot.slane %v26, %v321
  %v323 = vmul.f32 %v257, %v322
  %v324 = vmul.f32 %v261, %v322
  %v325 = vmul.f32 %v265, %v322
  %v326 = vmul.f32 %v269, %v322
  %v327 = vmul.f32 %v273, %v322
  %v328 = vmul.f32 %v277, %v322
  %v329 = vmul.f32 %v281, %v322
  %v330 = vmul.f32 %v285, %v322
  %v331 = vmul.f32 %v289, %v322
  %v332 = vmul.f32 %v293, %v322
  %v333 = vmul.f32 %v297, %v322
  %v334 = vmul.f32 %v301, %v322
  %v335 = vmul.f32 %v305, %v322
  %v336 = vmul.f32 %v309, %v322
  %v337 = vmul.f32 %v313, %v322
  %v338 = vmul.f32 %v317, %v322
  %v339 = vadd.f32 %v239, %v323
  %v340 = vadd.f32 %v240, %v324
  %v341 = vadd.f32 %v241, %v325
  %v342 = vadd.f32 %v242, %v326
  %v343 = vadd.f32 %v243, %v327
  %v344 = vadd.f32 %v244, %v328
  %v345 = vadd.f32 %v245, %v329
  %v346 = vadd.f32 %v246, %v330
  %v347 = vadd.f32 %v247, %v331
  %v348 = vadd.f32 %v248, %v332
  %v349 = vadd.f32 %v249, %v333
  %v350 = vadd.f32 %v250, %v334
  %v351 = vadd.f32 %v251, %v335
  %v352 = vadd.f32 %v252, %v336
  %v353 = vadd.f32 %v253, %v337
  %v354 = vadd.f32 %v254, %v338
  %355 = vset.pattern.permute.xlu0 2
  %356 = vperm.xlu0 %355, %v27
  %v357 = vpop.permute.xlu0 %356
  %359 = vset.pattern.permute.xlu0 2
  %360 = vperm.xlu0 %359, %v28
  %v361 = vpop.permute.xlu0 %360
  %363 = vset.pattern.permute.xlu0 2
  %364 = vperm.xlu0 %363, %v29
  %v365 = vpop.permute.xlu0 %364
  %367 = vset.pattern.permute.xlu0 2
  %368 = vperm.xlu0 %367, %v30
  %v369 = vpop.permute.xlu0 %368
  %371 = vset.pattern.permute.xlu0 2
  %372 = vperm.xlu0 %371, %v31
  %v373 = vpop.permute.xlu0 %372
  %375 = vset.pattern.permute.xlu0 2
  %376 = vperm.xlu0 %375, %v32
  %v377 = vpop.permute.xlu0 %376
  %379 = vset.pattern.permute.xlu0 2
  %380 = vperm.xlu0 %379, %v33
  %v381 = vpop.permute.xlu0 %380
  %383 = vset.pattern.permute.xlu0 2
  %384 = vperm.xlu0 %383, %v34
  %v385 = vpop.permute.xlu0 %384
  %387 = vset.pattern.permute.xlu0 2
  %388 = vperm.xlu0 %387, %v35
  %v389 = vpop.permute.xlu0 %388
  %391 = vset.pattern.permute.xlu0 2
  %392 = vperm.xlu0 %391, %v36
  %v393 = vpop.permute.xlu0 %392
  %395 = vset.pattern.permute.xlu0 2
  %396 = vperm.xlu0 %395, %v37
  %v397 = vpop.permute.xlu0 %396
  %399 = vset.pattern.permute.xlu0 2
  %400 = vperm.xlu0 %399, %v38
  %v401 = vpop.permute.xlu0 %400
  %403 = vset.pattern.permute.xlu0 2
  %404 = vperm.xlu0 %403, %v39
  %v405 = vpop.permute.xlu0 %404
  %407 = vset.pattern.permute.xlu0 2
  %408 = vperm.xlu0 %407, %v40
  %v409 = vpop.permute.xlu0 %408
  %411 = vset.pattern.permute.xlu0 2
  %412 = vperm.xlu0 %411, %v41
  %v413 = vpop.permute.xlu0 %412
  %415 = vset.pattern.permute.xlu0 2
  %416 = vperm.xlu0 %415, %v42
  %v417 = vpop.permute.xlu0 %416
  %v419 = vlaneseq
  %v420 = vshrl.u32 %v419, 7
  %v421 = vsub.s32 2, %v420
  %v422 = vrot.slane %v26, %v421
  %v423 = vmul.f32 %v357, %v422
  %v424 = vmul.f32 %v361, %v422
  %v425 = vmul.f32 %v365, %v422
  %v426 = vmul.f32 %v369, %v422
  %v427 = vmul.f32 %v373, %v422
  %v428 = vmul.f32 %v377, %v422
  %v429 = vmul.f32 %v381, %v422
  %v430 = vmul.f32 %v385, %v422
  %v431 = vmul.f32 %v389, %v422
  %v432 = vmul.f32 %v393, %v422
  %v433 = vmul.f32 %v397, %v422
  %v434 = vmul.f32 %v401, %v422
  %v435 = vmul.f32 %v405, %v422
  %v436 = vmul.f32 %v409, %v422
  %v437 = vmul.f32 %v413, %v422
  %v438 = vmul.f32 %v417, %v422
  %v439 = vadd.f32 %v339, %v423
  %v440 = vadd.f32 %v340, %v424
  %v441 = vadd.f32 %v341, %v425
  %v442 = vadd.f32 %v342, %v426
  %v443 = vadd.f32 %v343, %v427
  %v444 = vadd.f32 %v344, %v428
  %v445 = vadd.f32 %v345, %v429
  %v446 = vadd.f32 %v346, %v430
  %v447 = vadd.f32 %v347, %v431
  %v448 = vadd.f32 %v348, %v432
  %v449 = vadd.f32 %v349, %v433
  %v450 = vadd.f32 %v350, %v434
  %v451 = vadd.f32 %v351, %v435
  %v452 = vadd.f32 %v352, %v436
  %v453 = vadd.f32 %v353, %v437
  %v454 = vadd.f32 %v354, %v438
  %v455 = vmax.f32 %v439, 0.0
  %v456 = vmax.f32 %v440, 0.0
  %v457 = vmax.f32 %v441, 0.0
  %v458 = vmax.f32 %v442, 0.0
  %v459 = vmax.f32 %v443, 0.0
  %v460 = vmax.f32 %v444, 0.0
  %v461 = vmax.f32 %v445, 0.0
  %v462 = vmax.f32 %v446, 0.0
  %v463 = vmax.f32 %v447, 0.0
  %v464 = vmax.f32 %v448, 0.0
  %v465 = vmax.f32 %v449, 0.0
  %v466 = vmax.f32 %v450, 0.0
  %v467 = vmax.f32 %v451, 0.0
  %v468 = vmax.f32 %v452, 0.0
  %v469 = vmax.f32 %v453, 0.0
  %v470 = vmax.f32 %v454, 0.0
  %v471 = vld [vmem:[%s3] sm:$0xff]
  %v472 = vld [vmem:[%s3 + $0x8] sm:$0xff]
  %v473 = vld [vmem:[%s3 + $0x10] sm:$0xff]
  %v474 = vld [vmem:[%s3 + $0x18] sm:$0xff]
  %v475 = vld [vmem:[%s3 + $0x20] sm:$0xff]
  %v476 = vld [vmem:[%s3 + $0x28] sm:$0xff]
  %v477 = vld [vmem:[%s3 + $0x30] sm:$0xff]
  %v478 = vld [vmem:[%s3 + $0x38] sm:$0xff]
  %v479 = vld [vmem:[%s3 + $0x40] sm:$0xff]
  %v480 = vld [vmem:[%s3 + $0x48] sm:$0xff]
  %v481 = vld [vmem:[%s3 + $0x50] sm:$0xff]
  %v482 = vld [vmem:[%s3 + $0x58] sm:$0xff]
  %v483 = vld [vmem:[%s3 + $0x60] sm:$0xff]
  %v484 = vld [vmem:[%s3 + $0x68] sm:$0xff]
  %v485 = vld [vmem:[%s3 + $0x70] sm:$0xff]
  %v486 = vld [vmem:[%s3 + $0x78] sm:$0xff]
  %v487 = vld [vmem:[%s4] sm:$0xff]
  %v488 = vld [vmem:[%s4 + $0x8] sm:$0xff]
  %v489 = vld [vmem:[%s4 + $0x10] sm:$0xff]
  %v490 = vld [vmem:[%s4 + $0x18] sm:$0xff]
  %v491 = vld [vmem:[%s4 + $0x20] sm:$0xff]
  %v492 = vld [vmem:[%s4 + $0x28] sm:$0xff]
  %v493 = vld [vmem:[%s4 + $0x30] sm:$0xff]
  %v494 = vld [vmem:[%s4 + $0x38] sm:$0xff]
  %v495 = vld [vmem:[%s4 + $0x40] sm:$0xff]
  %v496 = vld [vmem:[%s4 + $0x48] sm:$0xff]
  %v497 = vld [vmem:[%s4 + $0x50] sm:$0xff]
  %v498 = vld [vmem:[%s4 + $0x58] sm:$0xff]
  %v499 = vld [vmem:[%s4 + $0x60] sm:$0xff]
  %v500 = vld [vmem:[%s4 + $0x68] sm:$0xff]
  %v501 = vld [vmem:[%s4 + $0x70] sm:$0xff]
  %v502 = vld [vmem:[%s4 + $0x78] sm:$0xff]
  %504 = vset.pattern.permute.xlu0 0
  %505 = vperm.xlu0 %504, %v487
  %v506 = vpop.permute.xlu0 %505
  %509 = vset.pattern.permute.xlu0 0
  %510 = vperm.xlu0 %509, %v488
  %v511 = vpop.permute.xlu0 %510
  %514 = vset.pattern.permute.xlu0 0
  %515 = vperm.xlu0 %514, %v489
  %v516 = vpop.permute.xlu0 %515
  %519 = vset.pattern.permute.xlu0 0
  %520 = vperm.xlu0 %519, %v490
  %v521 = vpop.permute.xlu0 %520
  %524 = vset.pattern.permute.xlu0 0
  %525 = vperm.xlu0 %524, %v491
  %v526 = vpop.permute.xlu0 %525
  %529 = vset.pattern.permute.xlu0 0
  %530 = vperm.xlu0 %529, %v492
  %v531 = vpop.permute.xlu0 %530
  %534 = vset.pattern.permute.xlu0 0
  %535 = vperm.xlu0 %534, %v493
  %v536 = vpop.permute.xlu0 %535
  %539 = vset.pattern.permute.xlu0 0
  %540 = vperm.xlu0 %539, %v494
  %v541 = vpop.permute.xlu0 %540
  %544 = vset.pattern.permute.xlu0 0
  %545 = vperm.xlu0 %544, %v495
  %v546 = vpop.permute.xlu0 %545
  %549 = vset.pattern.permute.xlu0 0
  %550 = vperm.xlu0 %549, %v496
  %v551 = vpop.permute.xlu0 %550
  %554 = vset.pattern.permute.xlu0 0
  %555 = vperm.xlu0 %554, %v497
  %v556 = vpop.permute.xlu0 %555
  %559 = vset.pattern.permute.xlu0 0
  %560 = vperm.xlu0 %559, %v498
  %v561 = vpop.permute.xlu0 %560
  %564 = vset.pattern.permute.xlu0 0
  %565 = vperm.xlu0 %564, %v499
  %v566 = vpop.permute.xlu0 %565
  %569 = vset.pattern.permute.xlu0 0
  %570 = vperm.xlu0 %569, %v500
  %v571 = vpop.permute.xlu0 %570
  %574 = vset.pattern.permute.xlu0 0
  %575 = vperm.xlu0 %574, %v501
  %v576 = vpop.permute.xlu0 %575
  %579 = vset.pattern.permute.xlu0 0
  %580 = vperm.xlu0 %579, %v502
  %v581 = vpop.permute.xlu0 %580
  %583 = vmatprep.subr.mxu0 0.0
  %584 = vmatpush1.msra.mxu0 %v470
  %585 = vmatprep.subr.mxu0 0.0
  %586 = vmatpush1.msra.mxu0 %v469
  %587 = vmatprep.subr.mxu0 0.0
  %588 = vmatpush1.msra.mxu0 %v468
  %589 = vmatprep.subr.mxu0 0.0
  %590 = vmatpush1.msra.mxu0 %v467
  %591 = vmatprep.subr.mxu0 0.0
  %592 = vmatpush1.msra.mxu0 %v466
  %593 = vmatprep.subr.mxu0 0.0
  %594 = vmatpush1.msra.mxu0 %v465
  %595 = vmatprep.subr.mxu0 0.0
  %596 = vmatpush1.msra.mxu0 %v464
  %597 = vmatprep.subr.mxu0 0.0
  %598 = vmatpush1.msra.mxu0 %v463
  %599 = vmatprep.subr.mxu0 0.0
  %600 = vmatpush1.msra.mxu0 %v462
  %601 = vmatprep.subr.mxu0 0.0
  %602 = vmatpush1.msra.mxu0 %v461
  %603 = vmatprep.subr.mxu0 0.0
  %604 = vmatpush1.msra.mxu0 %v460
  %605 = vmatprep.subr.mxu0 0.0
  %606 = vmatpush1.msra.mxu0 %v459
  %607 = vmatprep.subr.mxu0 0.0
  %608 = vmatpush1.msra.mxu0 %v458
  %609 = vmatprep.subr.mxu0 0.0
  %610 = vmatpush1.msra.mxu0 %v457
  %611 = vmatprep.subr.mxu0 0.0
  %612 = vmatpush1.msra.mxu0 %v456
  %613 = vmatprep.subr.mxu0 0.0
  %614 = vmatpush1.msra.mxu0 %v455
  %615 = vmatprep.subr.mxu0 0.0
  %616 = vmatpush2.msra.mxu0 0.0
  %617 = vmatprep.subr.mxu0 0.0
  %618 = vmatpush2.msra.mxu0 0.0
  %619 = vmatprep.subr.mxu0 0.0
  %620 = vmatpush2.msra.mxu0 0.0
  %621 = vmatprep.subr.mxu0 0.0
  %622 = vmatpush2.msra.mxu0 0.0
  %623 = vmatprep.subr.mxu0 0.0
  %624 = vmatpush2.msra.mxu0 0.0
  %625 = vmatprep.subr.mxu0 0.0
  %626 = vmatpush2.msra.mxu0 0.0
  %627 = vmatprep.subr.mxu0 0.0
  %628 = vmatpush2.msra.mxu0 0.0
  %629 = vmatprep.subr.mxu0 0.0
  %630 = vmatpush2.msra.mxu0 0.0
  %631 = vmatprep.subr.mxu0 0.0
  %632 = vmatpush2.msra.mxu0 0.0
  %633 = vmatprep.subr.mxu0 0.0
  %634 = vmatpush2.msra.mxu0 0.0
  %635 = vmatprep.subr.mxu0 0.0
  %636 = vmatpush2.msra.mxu0 0.0
  %637 = vmatprep.subr.mxu0 0.0
  %638 = vmatpush2.msra.mxu0 0.0
  %639 = vmatprep.subr.mxu0 0.0
  %640 = vmatpush2.msra.mxu0 0.0
  %641 = vmatprep.subr.mxu0 0.0
  %642 = vmatpush2.msra.mxu0 0.0
  %643 = vmatprep.subr.mxu0 0.0
  %644 = vmatpush2.msra.mxu0 0.0
  %645 = vmatprep.subr.mxu0 0.0
  %646 = vmatpush2.msra.mxu0 0.0
  %647 = vmatprep.mubr.f32.mxu0 0.0
  %648 = vmatmul.mubr.f32.gmra.mxu0 %v471
  %v649 = vpop.f32.mrf.mxu0
  %v650 = vadd.f32 %v506, %v649
  %v651 = vpop.f32.mrf.mxu0
  %652 = vmatprep.mubr.f32.mxu0 0.0
  %653 = vmatmul.mubr.f32.gmra.mxu0 %v472
  %v654 = vpop.f32.mrf.mxu0
  %v655 = vadd.f32 %v511, %v654
  %v656 = vpop.f32.mrf.mxu0
  %657 = vmatprep.mubr.f32.mxu0 0.0
  %658 = vmatmul.mubr.f32.gmra.mxu0 %v473
  %v659 = vpop.f32.mrf.mxu0
  %v660 = vadd.f32 %v516, %v659
  %v661 = vpop.f32.mrf.mxu0
  %662 = vmatprep.mubr.f32.mxu0 0.0
  %663 = vmatmul.mubr.f32.gmra.mxu0 %v474
  %v664 = vpop.f32.mrf.mxu0
  %v665 = vadd.f32 %v521, %v664
  %v666 = vpop.f32.mrf.mxu0
  %667 = vmatprep.mubr.f32.mxu0 0.0
  %668 = vmatmul.mubr.f32.gmra.mxu0 %v475
  %v669 = vpop.f32.mrf.mxu0
  %v670 = vadd.f32 %v526, %v669
  %v671 = vpop.f32.mrf.mxu0
  %672 = vmatprep.mubr.f32.mxu0 0.0
  %673 = vmatmul.mubr.f32.gmra.mxu0 %v476
  %v674 = vpop.f32.mrf.mxu0
  %v675 = vadd.f32 %v531, %v674
  %v676 = vpop.f32.mrf.mxu0
  %677 = vmatprep.mubr.f32.mxu0 0.0
  %678 = vmatmul.mubr.f32.gmra.mxu0 %v477
  %v679 = vpop.f32.mrf.mxu0
  %v680 = vadd.f32 %v536, %v679
  %v681 = vpop.f32.mrf.mxu0
  %682 = vmatprep.mubr.f32.mxu0 0.0
  %683 = vmatmul.mubr.f32.gmra.mxu0 %v478
  %v684 = vpop.f32.mrf.mxu0
  %v685 = vadd.f32 %v541, %v684
  %v686 = vpop.f32.mrf.mxu0
  %687 = vmatprep.mubr.f32.mxu0 0.0
  %688 = vmatmul.mubr.f32.gmra.mxu0 %v479
  %v689 = vpop.f32.mrf.mxu0
  %v690 = vadd.f32 %v546, %v689
  %v691 = vpop.f32.mrf.mxu0
  %692 = vmatprep.mubr.f32.mxu0 0.0
  %693 = vmatmul.mubr.f32.gmra.mxu0 %v480
  %v694 = vpop.f32.mrf.mxu0
  %v695 = vadd.f32 %v551, %v694
  %v696 = vpop.f32.mrf.mxu0
  %697 = vmatprep.mubr.f32.mxu0 0.0
  %698 = vmatmul.mubr.f32.gmra.mxu0 %v481
  %v699 = vpop.f32.mrf.mxu0
  %v700 = vadd.f32 %v556, %v699
  %v701 = vpop.f32.mrf.mxu0
  %702 = vmatprep.mubr.f32.mxu0 0.0
  %703 = vmatmul.mubr.f32.gmra.mxu0 %v482
  %v704 = vpop.f32.mrf.mxu0
  %v705 = vadd.f32 %v561, %v704
  %v706 = vpop.f32.mrf.mxu0
  %707 = vmatprep.mubr.f32.mxu0 0.0
  %708 = vmatmul.mubr.f32.gmra.mxu0 %v483
  %v709 = vpop.f32.mrf.mxu0
  %v710 = vadd.f32 %v566, %v709
  %v711 = vpop.f32.mrf.mxu0
  %712 = vmatprep.mubr.f32.mxu0 0.0
  %713 = vmatmul.mubr.f32.gmra.mxu0 %v484
  %v714 = vpop.f32.mrf.mxu0
  %v715 = vadd.f32 %v571, %v714
  %v716 = vpop.f32.mrf.mxu0
  %717 = vmatprep.mubr.f32.mxu0 0.0
  %718 = vmatmul.mubr.f32.gmra.mxu0 %v485
  %v719 = vpop.f32.mrf.mxu0
  %v720 = vadd.f32 %v576, %v719
  %v721 = vpop.f32.mrf.mxu0
  %722 = vmatprep.mubr.f32.mxu0 0.0
  %723 = vmatmul.mubr.f32.gmra.mxu0 %v486
  %v724 = vpop.f32.mrf.mxu0
  %v725 = vadd.f32 %v581, %v724
  %v726 = vpop.f32.mrf.mxu0
  %727 = vdwg.mxu0
  %v728 = vmax.f32 %v650, 0.0
  %v729 = vmax.f32 %v655, 0.0
  %v730 = vmax.f32 %v660, 0.0
  %v731 = vmax.f32 %v665, 0.0
  %v732 = vmax.f32 %v670, 0.0
  %v733 = vmax.f32 %v675, 0.0
  %v734 = vmax.f32 %v680, 0.0
  %v735 = vmax.f32 %v685, 0.0
  %v736 = vmax.f32 %v690, 0.0
  %v737 = vmax.f32 %v695, 0.0
  %v738 = vmax.f32 %v700, 0.0
  %v739 = vmax.f32 %v705, 0.0
  %v740 = vmax.f32 %v710, 0.0
  %v741 = vmax.f32 %v715, 0.0
  %v742 = vmax.f32 %v720, 0.0
  %v743 = vmax.f32 %v725, 0.0
  %v744 = vld [vmem:[%s5] sm:$0x3]
  %v745 = vld [vmem:[%s6] sm:$0x3]
  %747 = vset.pattern.permute.xlu0 0
  %748 = vperm.xlu0 %747, %v745
  %v749 = vpop.permute.xlu0 %748
  %751 = vmatprep.subr.mxu0 0.0
  %752 = vmatpush1.msra.mxu0 %v743
  %753 = vmatprep.subr.mxu0 0.0
  %754 = vmatpush1.msra.mxu0 %v742
  %755 = vmatprep.subr.mxu0 0.0
  %756 = vmatpush1.msra.mxu0 %v741
  %757 = vmatprep.subr.mxu0 0.0
  %758 = vmatpush1.msra.mxu0 %v740
  %759 = vmatprep.subr.mxu0 0.0
  %760 = vmatpush1.msra.mxu0 %v739
  %761 = vmatprep.subr.mxu0 0.0
  %762 = vmatpush1.msra.mxu0 %v738
  %763 = vmatprep.subr.mxu0 0.0
  %764 = vmatpush1.msra.mxu0 %v737
  %765 = vmatprep.subr.mxu0 0.0
  %766 = vmatpush1.msra.mxu0 %v736
  %767 = vmatprep.subr.mxu0 0.0
  %768 = vmatpush1.msra.mxu0 %v735
  %769 = vmatprep.subr.mxu0 0.0
  %770 = vmatpush1.msra.mxu0 %v734
  %771 = vmatprep.subr.mxu0 0.0
  %772 = vmatpush1.msra.mxu0 %v733
  %773 = vmatprep.subr.mxu0 0.0
  %774 = vmatpush1.msra.mxu0 %v732
  %775 = vmatprep.subr.mxu0 0.0
  %776 = vmatpush1.msra.mxu0 %v731
  %777 = vmatprep.subr.mxu0 0.0
  %778 = vmatpush1.msra.mxu0 %v730
  %779 = vmatprep.subr.mxu0 0.0
  %780 = vmatpush1.msra.mxu0 %v729
  %781 = vmatprep.subr.mxu0 0.0
  %782 = vmatpush1.msra.mxu0 %v728
  %783 = vmatprep.subr.mxu0 0.0
  %784 = vmatpush2.msra.mxu0 0.0
  %785 = vmatprep.subr.mxu0 0.0
  %786 = vmatpush2.msra.mxu0 0.0
  %787 = vmatprep.subr.mxu0 0.0
  %788 = vmatpush2.msra.mxu0 0.0
  %789 = vmatprep.subr.mxu0 0.0
  %790 = vmatpush2.msra.mxu0 0.0
  %791 = vmatprep.subr.mxu0 0.0
  %792 = vmatpush2.msra.mxu0 0.0
  %793 = vmatprep.subr.mxu0 0.0
  %794 = vmatpush2.msra.mxu0 0.0
  %795 = vmatprep.subr.mxu0 0.0
  %796 = vmatpush2.msra.mxu0 0.0
  %797 = vmatprep.subr.mxu0 0.0
  %798 = vmatpush2.msra.mxu0 0.0
  %799 = vmatprep.subr.mxu0 0.0
  %800 = vmatpush2.msra.mxu0 0.0
  %801 = vmatprep.subr.mxu0 0.0
  %802 = vmatpush2.msra.mxu0 0.0
  %803 = vmatprep.subr.mxu0 0.0
  %804 = vmatpush2.msra.mxu0 0.0
  %805 = vmatprep.subr.mxu0 0.0
  %806 = vmatpush2.msra.mxu0 0.0
  %807 = vmatprep.subr.mxu0 0.0
  %808 = vmatpush2.msra.mxu0 0.0
  %809 = vmatprep.subr.mxu0 0.0
  %810 = vmatpush2.msra.mxu0 0.0
  %811 = vmatprep.subr.mxu0 0.0
  %812 = vmatpush2.msra.mxu0 0.0
  %813 = vmatprep.subr.mxu0 0.0
  %814 = vmatpush2.msra.mxu0 0.0
  %815 = vmatprep.mubr.f32.mxu0 0.0
  %816 = vmatmul.mubr.f32.gmra.mxu0 %v744
  %v817 = vpop.f32.mrf.mxu0
  %v818 = vadd.f32 %v749, %v817
  %v819 = vpop.f32.mrf.mxu0
  %820 = vdwg.mxu0
  %v821 = vlaneseq
  %v822 = vshrl.u32 %v821, 7
  %vm823 = vcmp.lt.s32.totalorder %v822, 1
  %v824 = vtanh.pop %v818
  %v825 = vmax.f32 %v818, 0.0
  %v826 = vsel %vm823, %v824, %v825
  %827 = vst [vmem:[%s7] sm:$0x3] %v826
  // Predicated region
  $region30: #{policy_forward.1} parent=0 // pred_check
    _
  $region31: #{policy_forward.1} parent=0 // pred_check_branch
    %829 = sbr.rel (0) target = $region33
  $region32: #{policy_forward.1} parent=0 // pred_region
    _
  $region33: #{policy_forward.1} parent=0 // pred_fallthru
    _
  // Predicated region
  $region34: #{policy_forward.1} parent=0 // pred_check
    _
  $region35: #{policy_forward.1} parent=0 // pred_check_branch
    %831 = sbr.rel (0) target = $region37
  $region36: #{policy_forward.1} parent=0 // pred_region
    _
  $region37: #{policy_forward.1} parent=0 // pred_fallthru
    _

</llo_original>
